<compile_context>
chip_gen: v5e
topology: v5e:2x2
jax: 0.10.0
libtpu: 0.0.40
codegen_flags: <defaults>
</compile_context>

<pallas_src>
import functools

import jax
import jax.numpy as jnp
from jax.experimental import pallas as pl
from jax.experimental.pallas import tpu as pltpu

IGNORE_INDEX = 255


def _round_down(x, m):
    return (x // m) * m


def _round_up(x, m):
    return ((x + m - 1) // m) * m


def _sublane_multiple(itemsize):
    # Rows of a (C, TP) VMEM tile are padded to this many sublanes.
    return {1: 32, 2: 16, 4: 8}.get(int(itemsize), 8)


def _vmem_capacity_bytes():
    """Physical VMEM of the local TPU; conservative (v7x per-TC) fallback."""
    try:
        return int(pltpu.get_tpu_info().vmem_capacity_bytes)
    except Exception:
        return 64 * 1024 * 1024


def _per_lane_bytes(c, itemsize, num_outputs):
    """VMEM bytes per pixel lane: padded double-buffered tiles + scratch accumulators."""
    c_pad = _round_up(c, _sublane_multiple(itemsize))
    logits = 2 * num_outputs * c_pad * itemsize   # double-buffered logits tiles
    target = 2 * 8 * 4                            # (1, tp) int32, padded to 8 sublanes, x2
    scratch = (num_outputs + 1) * 8 * 4           # (1, tp) f32 accumulators
    return logits + target + scratch


def _choose_tp(hw, c, itemsize, num_outputs, budget_bytes):
    """Pixel-tile width: multiple of 128, as large as the VMEM budget allows."""
    per_lane = _per_lane_bytes(c, itemsize, num_outputs)
    tp = _round_down(budget_bytes // per_lane, 128)
    hw_floor = max(128, _round_down(hw, 128))     # keep block starts in-bounds
    tp = max(128, min(tp, hw_floor, 65536))
    return int(tp)


def _make_ce_kernel(num_outputs, C, TP, HW, inner_tiles, need_tail_mask, heavy_dtype):
    def kernel(*refs):
        # refs: target, logits_0..K-1, sum_0..K-1, cnt, acc_0..K-1, acc_cnt
        t_ref = refs[0]
        logits_refs = refs[1:1 + num_outputs]
        sum_refs = refs[1 + num_outputs:1 + 2 * num_outputs]
        cnt_ref = refs[1 + 2 * num_outputs]
        acc_refs = refs[2 + 2 * num_outputs:2 + 3 * num_outputs]
        acc_cnt_ref = refs[2 + 3 * num_outputs]

        o = pl.program_id(1)
        j = pl.program_id(2)

        @pl.when(j == 0)
        def _():
            for a in acc_refs:
                a[...] = jnp.zeros_like(a)
            acc_cnt_ref[...] = jnp.zeros_like(acc_cnt_ref)

        t = t_ref[0]                                     # (1, TP) int32 labels
        valid = t != IGNORE_INDEX                        # (1, TP) bool
        if need_tail_mask:
            # Use the UNclamped tile index so redundant/overhang tiles mask to zero.
            tile = o * inner_tiles + j
            pix = tile * TP + jax.lax.broadcasted_iota(jnp.int32, (1, TP), 1)
            valid = jnp.logical_and(valid, pix < HW)
        acc_cnt_ref[...] += valid.astype(jnp.float32)

        # One-hot over the class (sublane) axis, shared by all logits inputs.
        class_ids = jax.lax.broadcasted_iota(jnp.int32, (C, TP), 0)
        onehot = class_ids == t                          # (C, TP) bool
        # NOTE: targets in [C, 255) contribute loss = lse (one-hot matches nothing)
        # instead of raising like PyTorch.

        for k in range(num_outputs):
            x = logits_refs[k][0]                        # (C, TP) native dtype
            if x.dtype != heavy_dtype:
                x = x.astype(heavy_dtype)
            m = jnp.max(x, axis=0, keepdims=True)        # (1, TP) heavy_dtype
            p = jnp.exp(x - m)                           # heavy_dtype exp (bf16 on v6e/v7x)
            s = jnp.sum(p.astype(jnp.float32), axis=0, keepdims=True)
            lse = jnp.log(s) + m.astype(jnp.float32)
            x_t = jnp.sum(jnp.where(onehot, x, jnp.zeros_like(x)).astype(jnp.float32),
                          axis=0, keepdims=True)
            # Keep the masking a select (NOT multiply-by-mask): stale overhang lanes
            # may hold Inf/NaN and must not propagate.
            acc_refs[k][...] += jnp.where(valid, lse - x_t, 0.0)

        @pl.when(j == pl.num_programs(2) - 1)
        def _():
            for k in range(num_outputs):
                sum_refs[k][...] = jnp.sum(acc_refs[k][...]).reshape(1, 1, 1)
            cnt_ref[...] = jnp.sum(acc_cnt_ref[...]).reshape(1, 1, 1)

    return kernel


def _cross_entropy_losses(logits_tuple, target, tp_override=None):
    """Mean CE-with-ignore(255) for each NCHW logits array, sharing one NHW target."""
    num_outputs = len(logits_tuple)
    N, C, H, W = logits_tuple[0].shape
    HW = H * W
    dtype = logits_tuple[0].dtype
    itemsize = jnp.dtype(dtype).itemsize

    # Free views — no transpose, no pad, native logits dtype.
    x_list = tuple(x.reshape(N, C, HW) for x in logits_tuple)
    # TODO(synk): a uint8 target transport would cut label HBM traffic 4x; kept int32
    # to stay on well-trodden Mosaic layouts.
    t = target.reshape(N, 1, HW).astype(jnp.int32)

    cap = _vmem_capacity_bytes()
    budget = min(cap // 2, 64 * 1024 * 1024)         # total double-buffered footprint budget
    if tp_override is not None:
        tp = int(tp_override)
    else:
        tp = _choose_tp(HW, C, itemsize, num_outputs, budget)

    num_tiles = pl.cdiv(HW, tp)
    # Split the pixel axis so there are >= 2 parallel work units even when N == 1
    # (keeps both v7x TensorCores busy); harmless on single-TC v5e/v6e.
    p_outer = 2 if num_tiles >= 2 else 1
    inner_tiles = pl.cdiv(num_tiles, p_outer)
    need_tail_mask = (p_outer * inner_tiles * tp) != HW
    last_block = num_tiles - 1
    grid = (N, p_outer, inner_tiles)

    footprint = _per_lane_bytes(C, itemsize, num_outputs) * tp
    vmem_limit = int(min(cap - (8 << 20), footprint + (16 << 20)))
    vmem_limit = max(vmem_limit, 16 << 20)

    # bf16 logits keep the heavy per-class math in bf16 (v6e/v7x bf16 VPU/EUP);
    # f32 inputs compute in f32 (also the right choice on v5e).
    heavy_dtype = jnp.bfloat16 if dtype == jnp.bfloat16 else jnp.float32

    kernel = _make_ce_kernel(num_outputs, C, tp, HW, inner_tiles,
                             need_tail_mask, heavy_dtype)

    def _pix_block(i, o, j):
        # Clamp so any overhang tile from the outer split re-reads the last real
        # block; its lanes are fully masked by the in-kernel pix < HW check.
        return (i, 0, jnp.minimum(o * inner_tiles + j, last_block))

    in_specs = [pl.BlockSpec((1, 1, tp), _pix_block)]
    in_specs += [pl.BlockSpec((1, C, tp), _pix_block) for _ in range(num_outputs)]

    out_shape = tuple(jax.ShapeDtypeStruct((N, p_outer, 1), jnp.float32)
                      for _ in range(num_outputs + 1))
    out_specs = [pl.BlockSpec((1, 1, 1), lambda i, o, j: (i, o, 0))
                 for _ in range(num_outputs + 1)]

    scratch_shapes = [pltpu.VMEM((1, tp), jnp.float32)
                      for _ in range(num_outputs + 1)]

    elems = num_outputs * N * C * HW
    cost = pl.CostEstimate(
        flops=int(8 * elems),
        transcendentals=int(elems + num_outputs * N * HW),
        bytes_accessed=int(elems * itemsize + N * HW * 4
                           + 4 * (num_outputs + 1) * N * p_outer),
    )

    results = pl.pallas_call(
        kernel,
        out_shape=out_shape,
        grid_spec=pltpu.PrefetchScalarGridSpec(
            num_scalar_prefetch=0,
            grid=grid,
            in_specs=in_specs,
            out_specs=out_specs,
            scratch_shapes=scratch_shapes,
        ),
        compiler_params=pltpu.CompilerParams(
            dimension_semantics=("parallel", "parallel", "arbitrary"),
            vmem_limit_bytes=vmem_limit,
        ),
        cost_estimate=cost,
    )(t, *x_list)

    sums = results[:num_outputs]
    total_cnt = jnp.sum(results[num_outputs])
    # PyTorch mean reduction: sum over ALL valid pixels / total valid count.
    # (If every pixel is ignore_index this is 0/0 = NaN, matching torch.)
    return tuple(jnp.sum(s) / total_cnt for s in sums)


_cross_entropy_losses_jit = jax.jit(_cross_entropy_losses,
                                    static_argnames=("tp_override",))


def all_loss(output, target):
    """Mirror of the PyTorch all_loss.forward.

    output: tuple/list (output_1, output_2) of NCHW logits, or a single NCHW array.
    target: NHW integer labels (255 = ignore).
    """
    # TODO(synk): .cuda(non_blocking=True) device transfer has no JAX equivalent; arrays
    # are already on the default TPU device.
    if isinstance(output, (tuple, list)) and len(output) == 2:
        loss1, loss2 = _cross_entropy_losses_jit(tuple(output), target)
        return (loss1, loss2)
    else:
        (loss,) = _cross_entropy_losses_jit((output,), target)
        return loss


def _reference_ce(logits_nchw, target_nhw):
    """Pure-JAX reference for correctness checking."""
    x = jnp.transpose(logits_nchw, (0, 2, 3, 1)).astype(jnp.float32)  # NHWC
    t = target_nhw.astype(jnp.int32)
    logp = jax.nn.log_softmax(x, axis=-1)
    valid = t != IGNORE_INDEX
    t_safe = jnp.where(valid, t, 0)
    nll = -jnp.take_along_axis(logp, t_safe[..., None], axis=-1)[..., 0]
    nll = jnp.where(valid, nll, 0.0)
    return jnp.sum(nll) / jnp.sum(valid.astype(jnp.float32))


if __name__ == "__main__":
    key = jax.random.PRNGKey(0)
    k1, k2, k3, k4 = jax.random.split(key, 4)

    N, C, H, W = 2, 4, 16, 16
    output_1 = jax.random.normal(k1, (N, C, H, W), dtype=jnp.float32)
    output_2 = jax.random.normal(k2, (N, C, H, W), dtype=jnp.float32)
    target = jax.random.randint(k3, (N, H, W), 0, C, dtype=jnp.int32)
    ignore_mask = jax.random.bernoulli(k4, 0.15, (N, H, W))
    target = jnp.where(ignore_mask, IGNORE_INDEX, target)

    loss1, loss2 = all_loss((output_1, output_2), target)
    loss1 = jax.block_until_ready(loss1)
    loss2 = jax.block_until_ready(loss2)

    ref1 = _reference_ce(output_1, target)
    ref2 = _reference_ce(output_2, target)
    assert jnp.allclose(loss1, ref1, atol=1e-5, rtol=1e-5), (loss1, ref1)
    assert jnp.allclose(loss2, ref2, atol=1e-5, rtol=1e-5), (loss2, ref2)

    # single-output branch
    loss_single = jax.block_until_ready(all_loss(output_1, target))
    assert jnp.allclose(loss_single, ref1, atol=1e-5, rtol=1e-5)

    # ragged pixel count (HW not a multiple of the pixel tile) -> exercises the
    # in-kernel tail mask and the 2-way parallel pixel-outer split.
    k5, k6 = jax.random.split(k4)
    N2, C2, H2, W2 = 1, 5, 18, 18
    out_r = jax.random.normal(k5, (N2, C2, H2, W2), dtype=jnp.float32)
    tgt_r = jax.random.randint(k6, (N2, H2, W2), 0, C2, dtype=jnp.int32)
    tgt_r = tgt_r.at[0, 0, 0].set(IGNORE_INDEX)
    loss_r = jax.block_until_ready(all_loss(out_r, tgt_r))
    ref_r = _reference_ce(out_r, tgt_r)
    assert jnp.allclose(loss_r, ref_r, atol=1e-5, rtol=1e-5), (loss_r, ref_r)

    # Force a small tile so the pixel-tile count is odd (3): exercises the clamped
    # redundant overhang tile on the parallel outer pixel axis.
    (loss_c,) = _cross_entropy_losses_jit((out_r,), tgt_r, tp_override=128)
    loss_c = jax.block_until_ready(loss_c)
    assert jnp.allclose(loss_c, ref_r, atol=1e-5, rtol=1e-5), (loss_c, ref_r)

    # bf16 logits: heavy per-class math stays bf16 (loose tolerance vs f32 reference).
    k7, k8 = jax.random.split(k6)
    N3, C3, H3, W3 = 1, 3, 24, 24
    out_b = jax.random.normal(k7, (N3, C3, H3, W3),
                              dtype=jnp.float32).astype(jnp.bfloat16)
    tgt_b = jax.random.randint(k8, (N3, H3, W3), 0, C3, dtype=jnp.int32)
    loss_b = jax.block_until_ready(all_loss(out_b, tgt_b))
    ref_b = _reference_ce(out_b, tgt_b)
    assert jnp.allclose(loss_b, ref_b, atol=5e-2, rtol=5e-2), (loss_b, ref_b)

    print("KERNEL_OK")
</pallas_src>

<mosaic_0001>
module attributes {stable_mosaic.version = 11 : i64} {
  func.func @kernel(%arg0: i32, %arg1: i32, %arg2: i32, %arg3: memref<1x1x256xi32, #tpu.memory_space<vmem>>, %arg4: memref<1x4x256xf32, #tpu.memory_space<vmem>>, %arg5: memref<1x4x256xf32, #tpu.memory_space<vmem>>, %arg6: memref<1x1x1xf32, #tpu.memory_space<vmem>>, %arg7: memref<1x1x1xf32, #tpu.memory_space<vmem>>, %arg8: memref<1x1x1xf32, #tpu.memory_space<vmem>>, %arg9: memref<1x256xf32, #tpu.memory_space<vmem>>, %arg10: memref<1x256xf32, #tpu.memory_space<vmem>>, %arg11: memref<1x256xf32, #tpu.memory_space<vmem>>) attributes {dimension_semantics = [#tpu.dimension_semantics<parallel>, #tpu.dimension_semantics<parallel>, #tpu.dimension_semantics<arbitrary>], iteration_bounds = array<i64: 2, 1, 1>, scalar_prefetch = 0 : i64, scratch_operands = 3 : i64, tpu.core_type = #tpu.core_type<tc>, window_params = [{transform_indices = @transform_0, window_bounds = array<i64: 1, 1, 256>}, {transform_indices = @transform_1, window_bounds = array<i64: 1, 4, 256>}, {transform_indices = @transform_2, window_bounds = array<i64: 1, 4, 256>}, {transform_indices = @transform_3, window_bounds = array<i64: 1, 1, 1>}, {transform_indices = @transform_4, window_bounds = array<i64: 1, 1, 1>}, {transform_indices = @transform_5, window_bounds = array<i64: 1, 1, 1>}]} {
    %c0_i32 = arith.constant 0 : i32
    %0 = arith.cmpi eq, %arg2, %c0_i32 : i32
    %1 = arith.extui %0 : i1 to i32
    %c0_i32_0 = arith.constant 0 : i32
    %2 = arith.cmpi ne, %1, %c0_i32_0 : i32
    scf.if %2 {
      %cst_32 = arith.constant 0.000000e+00 : f32
      %60 = vector.broadcast %cst_32 : f32 to vector<1x256xf32>
      %c0_33 = arith.constant 0 : index
      %c0_34 = arith.constant 0 : index
      %61 = vector.load %arg9[%c0_33, %c0_34] : memref<1x256xf32, #tpu.memory_space<vmem>>, vector<1x256xf32>
      tpu.vector_store %arg9[%c0_33, %c0_34], %60 {strides = array<i32>} : memref<1x256xf32, #tpu.memory_space<vmem>>, vector<1x256xf32>,
      %cst_35 = arith.constant 0.000000e+00 : f32
      %62 = vector.broadcast %cst_35 : f32 to vector<1x256xf32>
      %c0_36 = arith.constant 0 : index
      %c0_37 = arith.constant 0 : index
      %63 = vector.load %arg10[%c0_36, %c0_37] : memref<1x256xf32, #tpu.memory_space<vmem>>, vector<1x256xf32>
      tpu.vector_store %arg10[%c0_36, %c0_37], %62 {strides = array<i32>} : memref<1x256xf32, #tpu.memory_space<vmem>>, vector<1x256xf32>,
      %cst_38 = arith.constant 0.000000e+00 : f32
      %64 = vector.broadcast %cst_38 : f32 to vector<1x256xf32>
      %c0_39 = arith.constant 0 : index
      %c0_40 = arith.constant 0 : index
      %65 = vector.load %arg11[%c0_39, %c0_40] : memref<1x256xf32, #tpu.memory_space<vmem>>, vector<1x256xf32>
      tpu.vector_store %arg11[%c0_39, %c0_40], %64 {strides = array<i32>} : memref<1x256xf32, #tpu.memory_space<vmem>>, vector<1x256xf32>,
    } else {
    }
    %c0 = arith.constant 0 : index
    %c0_1 = arith.constant 0 : index
    %c0_2 = arith.constant 0 : index
    %3 = vector.load %arg3[%c0, %c0_1, %c0_2] : memref<1x1x256xi32, #tpu.memory_space<vmem>>, vector<1x1x256xi32>
    %4 = vector.shape_cast %3 : vector<1x1x256xi32> to vector<1x256xi32>
    %c255_i32 = arith.constant 255 : i32
    %5 = vector.broadcast %c255_i32 : i32 to vector<1x256xi32>
    %6 = arith.cmpi ne, %4, %5 : vector<1x256xi32>
    %c0_3 = arith.constant 0 : index
    %c0_4 = arith.constant 0 : index
    %7 = vector.load %arg11[%c0_3, %c0_4] : memref<1x256xf32, #tpu.memory_space<vmem>>, vector<1x256xf32>
    %8 = arith.extui %6 : vector<1x256xi1> to vector<1x256xi32>
    %9 = arith.sitofp %8 : vector<1x256xi32> to vector<1x256xf32>
    %10 = arith.addf %7, %9 : vector<1x256xf32>
    %c0_5 = arith.constant 0 : index
    %c0_6 = arith.constant 0 : index
    %11 = vector.load %arg11[%c0_5, %c0_6] : memref<1x256xf32, #tpu.memory_space<vmem>>, vector<1x256xf32>
    tpu.vector_store %arg11[%c0_5, %c0_6], %10 {strides = array<i32>} : memref<1x256xf32, #tpu.memory_space<vmem>>, vector<1x256xf32>,
    %12 = tpu.iota {dimensions = array<i32: 0>} : vector<4x256xi32>
    %13 = vector.broadcast %4 : vector<1x256xi32> to vector<4x256xi32>
    %14 = arith.cmpi eq, %12, %13 : vector<4x256xi32>
    %c0_7 = arith.constant 0 : index
    %c0_8 = arith.constant 0 : index
    %c0_9 = arith.constant 0 : index
    %15 = vector.load %arg4[%c0_7, %c0_8, %c0_9] : memref<1x4x256xf32, #tpu.memory_space<vmem>>, vector<1x4x256xf32>
    %16 = vector.shape_cast %15 : vector<1x4x256xf32> to vector<4x256xf32>
    %cst = arith.constant dense<0xFF800000> : vector<256xf32>
    %17 = vector.multi_reduction <maximumf>, %16, %cst [0] : vector<4x256xf32> to vector<256xf32>
    %18 = vector.shape_cast %17 : vector<256xf32> to vector<1x256xf32>
    %19 = vector.broadcast %18 : vector<1x256xf32> to vector<4x256xf32>
    %20 = arith.subf %16, %19 : vector<4x256xf32>
    %21 = math.exp %20 : vector<4x256xf32>
    %cst_10 = arith.constant dense<0.000000e+00> : vector<256xf32>
    %22 = vector.multi_reduction <add>, %21, %cst_10 [0] : vector<4x256xf32> to vector<256xf32>
    %23 = vector.shape_cast %22 : vector<256xf32> to vector<1x256xf32>
    %24 = math.log %23 : vector<1x256xf32>
    %25 = arith.addf %24, %18 : vector<1x256xf32>
    %cst_11 = arith.constant 0.000000e+00 : f32
    %26 = vector.broadcast %cst_11 : f32 to vector<4x256xf32>
    %27 = arith.select %14, %16, %26 : vector<4x256xi1>, vector<4x256xf32>
    %cst_12 = arith.constant dense<0.000000e+00> : vector<256xf32>
    %28 = vector.multi_reduction <add>, %27, %cst_12 [0] : vector<4x256xf32> to vector<256xf32>
    %29 = vector.shape_cast %28 : vector<256xf32> to vector<1x256xf32>
    %c0_13 = arith.constant 0 : index
    %c0_14 = arith.constant 0 : index
    %30 = vector.load %arg9[%c0_13, %c0_14] : memref<1x256xf32, #tpu.memory_space<vmem>>, vector<1x256xf32>
    %31 = arith.subf %25, %29 : vector<1x256xf32>
    %cst_15 = arith.constant 0.000000e+00 : f32
    %32 = vector.broadcast %cst_15 : f32 to vector<1x256xf32>
    %33 = arith.select %6, %31, %32 : vector<1x256xi1>, vector<1x256xf32>
    %34 = arith.addf %30, %33 : vector<1x256xf32>
    %c0_16 = arith.constant 0 : index
    %c0_17 = arith.constant 0 : index
    %35 = vector.load %arg9[%c0_16, %c0_17] : memref<1x256xf32, #tpu.memory_space<vmem>>, vector<1x256xf32>
    tpu.vector_store %arg9[%c0_16, %c0_17], %34 {strides = array<i32>} : memref<1x256xf32, #tpu.memory_space<vmem>>, vector<1x256xf32>,
    %c0_18 = arith.constant 0 : index
    %c0_19 = arith.constant 0 : index
    %c0_20 = arith.constant 0 : index
    %36 = vector.load %arg5[%c0_18, %c0_19, %c0_20] : memref<1x4x256xf32, #tpu.memory_space<vmem>>, vector<1x4x256xf32>
    %37 = vector.shape_cast %36 : vector<1x4x256xf32> to vector<4x256xf32>
    %cst_21 = arith.constant dense<0xFF800000> : vector<256xf32>
    %38 = vector.multi_reduction <maximumf>, %37, %cst_21 [0] : vector<4x256xf32> to vector<256xf32>
    %39 = vector.shape_cast %38 : vector<256xf32> to vector<1x256xf32>
    %40 = vector.broadcast %39 : vector<1x256xf32> to vector<4x256xf32>
    %41 = arith.subf %37, %40 : vector<4x256xf32>
    %42 = math.exp %41 : vector<4x256xf32>
    %cst_22 = arith.constant dense<0.000000e+00> : vector<256xf32>
    %43 = vector.multi_reduction <add>, %42, %cst_22 [0] : vector<4x256xf32> to vector<256xf32>
    %44 = vector.shape_cast %43 : vector<256xf32> to vector<1x256xf32>
    %45 = math.log %44 : vector<1x256xf32>
    %46 = arith.addf %45, %39 : vector<1x256xf32>
    %cst_23 = arith.constant 0.000000e+00 : f32
    %47 = vector.broadcast %cst_23 : f32 to vector<4x256xf32>
    %48 = arith.select %14, %37, %47 : vector<4x256xi1>, vector<4x256xf32>
    %cst_24 = arith.constant dense<0.000000e+00> : vector<256xf32>
    %49 = vector.multi_reduction <add>, %48, %cst_24 [0] : vector<4x256xf32> to vector<256xf32>
    %50 = vector.shape_cast %49 : vector<256xf32> to vector<1x256xf32>
    %c0_25 = arith.constant 0 : index
    %c0_26 = arith.constant 0 : index
    %51 = vector.load %arg10[%c0_25, %c0_26] : memref<1x256xf32, #tpu.memory_space<vmem>>, vector<1x256xf32>
    %52 = arith.subf %46, %50 : vector<1x256xf32>
    %cst_27 = arith.constant 0.000000e+00 : f32
    %53 = vector.broadcast %cst_27 : f32 to vector<1x256xf32>
    %54 = arith.select %6, %52, %53 : vector<1x256xi1>, vector<1x256xf32>
    %55 = arith.addf %51, %54 : vector<1x256xf32>
    %c0_28 = arith.constant 0 : index
    %c0_29 = arith.constant 0 : index
    %56 = vector.load %arg10[%c0_28, %c0_29] : memref<1x256xf32, #tpu.memory_space<vmem>>, vector<1x256xf32>
    tpu.vector_store %arg10[%c0_28, %c0_29], %55 {strides = array<i32>} : memref<1x256xf32, #tpu.memory_space<vmem>>, vector<1x256xf32>,
    %c0_i32_30 = arith.constant 0 : i32
    %57 = arith.cmpi eq, %arg2, %c0_i32_30 : i32
    %58 = arith.extui %57 : i1 to i32
    %c0_i32_31 = arith.constant 0 : i32
    %59 = arith.cmpi ne, %58, %c0_i32_31 : i32
    scf.if %59 {
      %c0_32 = arith.constant 0 : index
      %c0_33 = arith.constant 0 : index
      %60 = vector.load %arg9[%c0_32, %c0_33] : memref<1x256xf32, #tpu.memory_space<vmem>>, vector<1x256xf32>
      %61 = vector.shape_cast %60 : vector<1x256xf32> to vector<1x1x256xf32>
      %cst_34 = arith.constant dense<0.000000e+00> : vector<1xf32>
      %62 = vector.multi_reduction <add>, %61, %cst_34 [1, 2] : vector<1x1x256xf32> to vector<1xf32>
      %63 = vector.shape_cast %62 : vector<1xf32> to vector<1x1x1xf32>
      %64 = vector.extract %63[0, 0, 0] : f32 from vector<1x1x1xf32>
      %65 = vector.broadcast %64 : f32 to vector<1x1x1xf32>
      %c0_35 = arith.constant 0 : index
      %c0_36 = arith.constant 0 : index
      %c0_37 = arith.constant 0 : index
      %66 = vector.load %arg6[%c0_35, %c0_36, %c0_37] : memref<1x1x1xf32, #tpu.memory_space<vmem>>, vector<1x1x1xf32>
      tpu.vector_store %arg6[%c0_35, %c0_36, %c0_37], %65 {strides = array<i32>} : memref<1x1x1xf32, #tpu.memory_space<vmem>>, vector<1x1x1xf32>,
      %c0_38 = arith.constant 0 : index
      %c0_39 = arith.constant 0 : index
      %67 = vector.load %arg10[%c0_38, %c0_39] : memref<1x256xf32, #tpu.memory_space<vmem>>, vector<1x256xf32>
      %68 = vector.shape_cast %67 : vector<1x256xf32> to vector<1x1x256xf32>
      %cst_40 = arith.constant dense<0.000000e+00> : vector<1xf32>
      %69 = vector.multi_reduction <add>, %68, %cst_40 [1, 2] : vector<1x1x256xf32> to vector<1xf32>
      %70 = vector.shape_cast %69 : vector<1xf32> to vector<1x1x1xf32>
      %71 = vector.extract %70[0, 0, 0] : f32 from vector<1x1x1xf32>
      %72 = vector.broadcast %71 : f32 to vector<1x1x1xf32>
      %c0_41 = arith.constant 0 : index
      %c0_42 = arith.constant 0 : index
      %c0_43 = arith.constant 0 : index
      %73 = vector.load %arg7[%c0_41, %c0_42, %c0_43] : memref<1x1x1xf32, #tpu.memory_space<vmem>>, vector<1x1x1xf32>
      tpu.vector_store %arg7[%c0_41, %c0_42, %c0_43], %72 {strides = array<i32>} : memref<1x1x1xf32, #tpu.memory_space<vmem>>, vector<1x1x1xf32>,
      %c0_44 = arith.constant 0 : index
      %c0_45 = arith.constant 0 : index
      %74 = vector.load %arg11[%c0_44, %c0_45] : memref<1x256xf32, #tpu.memory_space<vmem>>, vector<1x256xf32>
      %75 = vector.shape_cast %74 : vector<1x256xf32> to vector<1x1x256xf32>
      %cst_46 = arith.constant dense<0.000000e+00> : vector<1xf32>
      %76 = vector.multi_reduction <add>, %75, %cst_46 [1, 2] : vector<1x1x256xf32> to vector<1xf32>
      %77 = vector.shape_cast %76 : vector<1xf32> to vector<1x1x1xf32>
      %78 = vector.extract %77[0, 0, 0] : f32 from vector<1x1x1xf32>
      %79 = vector.broadcast %78 : f32 to vector<1x1x1xf32>
      %c0_47 = arith.constant 0 : index
      %c0_48 = arith.constant 0 : index
      %c0_49 = arith.constant 0 : index
      %80 = vector.load %arg8[%c0_47, %c0_48, %c0_49] : memref<1x1x1xf32, #tpu.memory_space<vmem>>, vector<1x1x1xf32>
      tpu.vector_store %arg8[%c0_47, %c0_48, %c0_49], %79 {strides = array<i32>} : memref<1x1x1xf32, #tpu.memory_space<vmem>>, vector<1x1x1xf32>,
    } else {
    }
    return
  }
  func.func @transform_0(%arg0: i32, %arg1: i32, %arg2: i32) -> (i32, i32, i32) {
    %c1_i32 = arith.constant 1 : i32
    %0 = arith.muli %arg1, %c1_i32 : i32
    %1 = arith.addi %0, %arg2 : i32
    %c0_i32 = arith.constant 0 : i32
    %2 = arith.minsi %1, %c0_i32 : i32
    %c0_i32_0 = arith.constant 0 : i32
    %c0_i32_1 = arith.constant 0 : i32
    return %arg0, %c0_i32_0, %2 : i32, i32, i32
  }
  func.func @transform_1(%arg0: i32, %arg1: i32, %arg2: i32) -> (i32, i32, i32) {
    %c1_i32 = arith.constant 1 : i32
    %0 = arith.muli %arg1, %c1_i32 : i32
    %1 = arith.addi %0, %arg2 : i32
    %c0_i32 = arith.constant 0 : i32
    %2 = arith.minsi %1, %c0_i32 : i32
    %c0_i32_0 = arith.constant 0 : i32
    %c0_i32_1 = arith.constant 0 : i32
    return %arg0, %c0_i32_0, %2 : i32, i32, i32
  }
  func.func @transform_2(%arg0: i32, %arg1: i32, %arg2: i32) -> (i32, i32, i32) {
    %c1_i32 = arith.constant 1 : i32
    %0 = arith.muli %arg1, %c1_i32 : i32
    %1 = arith.addi %0, %arg2 : i32
    %c0_i32 = arith.constant 0 : i32
    %2 = arith.minsi %1, %c0_i32 : i32
    %c0_i32_0 = arith.constant 0 : i32
    %c0_i32_1 = arith.constant 0 : i32
    return %arg0, %c0_i32_0, %2 : i32, i32, i32
  }
  func.func @transform_3(%arg0: i32, %arg1: i32, %arg2: i32) -> (i32, i32, i32) {
    %c0_i32 = arith.constant 0 : i32
    %c0_i32_0 = arith.constant 0 : i32
    return %arg0, %arg1, %c0_i32 : i32, i32, i32
  }
  func.func @transform_4(%arg0: i32, %arg1: i32, %arg2: i32) -> (i32, i32, i32) {
    %c0_i32 = arith.constant 0 : i32
    %c0_i32_0 = arith.constant 0 : i32
    return %arg0, %arg1, %c0_i32 : i32, i32, i32
  }
  func.func @transform_5(%arg0: i32, %arg1: i32, %arg2: i32) -> (i32, i32, i32) {
    %c0_i32 = arith.constant 0 : i32
    %c0_i32_0 = arith.constant 0 : i32
    return %arg0, %arg1, %c0_i32 : i32, i32, i32
  }
}

</mosaic_0001>

<llo_original>
// kernel: _cross_entropy_losses.1
$region0: #{_cross_entropy_losses.1}
  #allocation0 [shape = 'u32[]', space=smem, size = 0x4, offset = 0x4, fixed_abs, tag = 'smem constant byte address 0x4 - core index']
  #allocation1 [shape = 'u32[72,128]{1,0:T(1,128)}', space=vmem, size = 0x9000, scoped, tag = 'internal scratch']
  #allocation2 [shape = 'f32[1,256]{1,0:T(1,128)}', space=vmem, size = 0x400, scoped, tag = 'scratch operand']
  #allocation3 [shape = 'f32[1,256]{1,0:T(1,128)}', space=vmem, size = 0x400, scoped, tag = 'scratch operand']
  #allocation4 [shape = 'f32[1,256]{1,0:T(1,128)}', space=vmem, size = 0x400, scoped, tag = 'scratch operand']
  %s0 = inlined_call_operand.vmem [shape: s32[2,1,256], index: 0, kind: input, shape index: {}]
  %s1 = inlined_call_operand.vmem [shape: f32[2,4,256], index: 1, kind: input, shape index: {}]
  %s2 = inlined_call_operand.vmem [shape: f32[2,4,256], index: 2, kind: input, shape index: {}]
  %s3 = inlined_call_operand.vmem [shape: f32[2,1,1], index: 3, kind: output, shape index: {0}]
  %s4 = inlined_call_operand.vmem [shape: f32[2,1,1], index: 4, kind: output, shape index: {1}]
  %s5 = inlined_call_operand.vmem [shape: f32[2,1,1], index: 5, kind: output, shape index: {2}]
  %6 = xla_tuple %s3, %s4, %s5
  %s7 = sld [smem:[#allocation0]]
  $region69: #{_cross_entropy_losses.1} parent=0
    _
  %s9 = ssub.s32 1, %s7
  %s10 = scalar_select 0, %s9, %s7
  loop: start=0, step=1, limit=4
  $region2: #{_cross_entropy_losses.1} parent=0 // loop_pre_header
    _
  $region3: #{_cross_entropy_losses.1} parent=0 // loop_header
    %s12 = sphi 0, %s16
    %p13 = scmp.ge.s32.totalorder %s12, 4
    %s19 = sphi 0, %s38
    %s20 = sphi 0, %s34
    %s21 = sphi 0, %s30
    %s22 = sphi 0, %s19
    %s23 = sphi 0, %s20
    %s24 = sphi 0, %s21
    %s25 = sphi 0, %s22
    %s26 = sphi 0, %s23
    %s27 = sphi 0, %s24
    %s49 = sphi 0, %s51
    %s52 = sphi 0, %s49
    %s53 = sphi 0, %s52
    %s69 = sphi 0, %s53
    %s83 = sphi 0, %s85
    %s86 = sphi 0, %s83
    %s87 = sphi 0, %s86
    %s103 = sphi 0, %s87
    %s117 = sphi 0, %s119
    %s120 = sphi 0, %s117
    %s121 = sphi 0, %s120
    %s137 = sphi 0, %s121
    %s145 = sphi 0, %s147
    %s148 = sphi 0, %s145
    %s149 = sphi 0, %s148
    %s165 = sphi 0, %s149
    %s173 = sphi 0, %s175
    %s176 = sphi 0, %s173
    %s177 = sphi 0, %s176
    %s193 = sphi 0, %s177
    %s201 = sphi 0, %s203
    %s204 = sphi 0, %s201
    %s205 = sphi 0, %s204
    %s221 = sphi 0, %s205
  $region4: #{_cross_entropy_losses.1} parent=0 // loop_header_branch
    %15 = sbr.rel (%p13) target = $region8
  $region5: #{_cross_entropy_losses.1} parent=0 // loop_body
    %s17 = ssub.s32 %s12, 1
    %s18 = ssub.s32 %s12, 2
    %s28 = sadd.s32 1, %s21
    %p29 = scmp.ge.s32.totalorder %s28, 1
    %s30 = scalar_select %p29, 0, %s28
    %s31 = sadd.s32 1, %s20
    %s32 = scalar_select %p29, %s31, %s20
    %p33 = scmp.ge.s32.totalorder %s32, 1
    %s34 = scalar_select %p33, 0, %s32
    %s35 = sadd.s32 1, %s19
    %s36 = scalar_select %p33, %s35, %s19
    %p37 = scmp.ge.s32.totalorder %s36, 2
    %s38 = scalar_select %p37, 0, %s36
    %s39 = sadd.s32 %s20, %s21
    %p40 = scmp.lt.s32.totalorder %s39, 0
    %s41 = scalar_select %p40, %s39, 0
    %s42 = sadd.s32 %s34, %s30
    %p43 = scmp.lt.s32.totalorder %s42, 0
    %s44 = scalar_select %p43, %s42, 0
    %s45 = ssub.s32 %s19, %s38
    %s46 = ssub.s32 %s41, %s44
    %s47 = sor.u32 %s45, %s46
    %p48 = scmp.eq.s32.totalorder %s47, 0
    %s50 = sadd.s32 %s49, 1
    %s51 = scalar_select %p48, %s49, %s50
    %p54 = pneg %p48
    %p55 = scmp.eq.s32.totalorder %s12, 1
    %p56 = por %p54, %p55
    %p57 = scmp.ne.s32.totalorder %s49, %s52
    %p58 = scmp.eq.s32.totalorder %s12, 0
    %p59 = por %p57, %p58
    %p60 = scmp.ne.s32.totalorder %s49, %s52
    %p61 = scmp.eq.s32.totalorder %s17, 1
    %p62 = por %p60, %p61
    %p63 = scmp.ne.s32.totalorder %s52, %s53
    %p64 = scmp.eq.s32.totalorder %s17, 0
    %p65 = por %p63, %p64
    %p66 = scmp.ne.s32.totalorder %s52, %s53
    %p67 = scmp.eq.s32.totalorder %s18, 1
    %p68 = por %p66, %p67
    %p70 = scmp.ne.s32.totalorder %s53, %s69
    %p71 = scmp.eq.s32.totalorder %s18, 0
    %p72 = por %p70, %p71
    %s73 = sadd.s32 %s20, %s21
    %p74 = scmp.lt.s32.totalorder %s73, 0
    %s75 = scalar_select %p74, %s73, 0
    %s76 = sadd.s32 %s34, %s30
    %p77 = scmp.lt.s32.totalorder %s76, 0
    %s78 = scalar_select %p77, %s76, 0
    %s79 = ssub.s32 %s19, %s38
    %s80 = ssub.s32 %s75, %s78
    %s81 = sor.u32 %s79, %s80
    %p82 = scmp.eq.s32.totalorder %s81, 0
    %s84 = sadd.s32 %s83, 1
    %s85 = scalar_select %p82, %s83, %s84
    %p88 = pneg %p82
    %p89 = scmp.eq.s32.totalorder %s12, 1
    %p90 = por %p88, %p89
    %p91 = scmp.ne.s32.totalorder %s83, %s86
    %p92 = scmp.eq.s32.totalorder %s12, 0
    %p93 = por %p91, %p92
    %p94 = scmp.ne.s32.totalorder %s83, %s86
    %p95 = scmp.eq.s32.totalorder %s17, 1
    %p96 = por %p94, %p95
    %p97 = scmp.ne.s32.totalorder %s86, %s87
    %p98 = scmp.eq.s32.totalorder %s17, 0
    %p99 = por %p97, %p98
    %p100 = scmp.ne.s32.totalorder %s86, %s87
    %p101 = scmp.eq.s32.totalorder %s18, 1
    %p102 = por %p100, %p101
    %p104 = scmp.ne.s32.totalorder %s87, %s103
    %p105 = scmp.eq.s32.totalorder %s18, 0
    %p106 = por %p104, %p105
    %s107 = sadd.s32 %s20, %s21
    %p108 = scmp.lt.s32.totalorder %s107, 0
    %s109 = scalar_select %p108, %s107, 0
    %s110 = sadd.s32 %s34, %s30
    %p111 = scmp.lt.s32.totalorder %s110, 0
    %s112 = scalar_select %p111, %s110, 0
    %s113 = ssub.s32 %s19, %s38
    %s114 = ssub.s32 %s109, %s112
    %s115 = sor.u32 %s113, %s114
    %p116 = scmp.eq.s32.totalorder %s115, 0
    %s118 = sadd.s32 %s117, 1
    %s119 = scalar_select %p116, %s117, %s118
    %p122 = pneg %p116
    %p123 = scmp.eq.s32.totalorder %s12, 1
    %p124 = por %p122, %p123
    %p125 = scmp.ne.s32.totalorder %s117, %s120
    %p126 = scmp.eq.s32.totalorder %s12, 0
    %p127 = por %p125, %p126
    %p128 = scmp.ne.s32.totalorder %s117, %s120
    %p129 = scmp.eq.s32.totalorder %s17, 1
    %p130 = por %p128, %p129
    %p131 = scmp.ne.s32.totalorder %s120, %s121
    %p132 = scmp.eq.s32.totalorder %s17, 0
    %p133 = por %p131, %p132
    %p134 = scmp.ne.s32.totalorder %s120, %s121
    %p135 = scmp.eq.s32.totalorder %s18, 1
    %p136 = por %p134, %p135
    %p138 = scmp.ne.s32.totalorder %s121, %s137
    %p139 = scmp.eq.s32.totalorder %s18, 0
    %p140 = por %p138, %p139
    %s141 = ssub.s32 %s19, %s38
    %s142 = ssub.s32 %s20, %s34
    %s143 = sor.u32 %s141, %s142
    %p144 = scmp.eq.s32.totalorder %s143, 0
    %s146 = sadd.s32 %s145, 1
    %s147 = scalar_select %p144, %s145, %s146
    %p150 = pneg %p144
    %p151 = scmp.eq.s32.totalorder %s12, 1
    %p152 = por %p150, %p151
    %p153 = scmp.ne.s32.totalorder %s145, %s148
    %p154 = scmp.eq.s32.totalorder %s12, 0
    %p155 = por %p153, %p154
    %p156 = scmp.ne.s32.totalorder %s145, %s148
    %p157 = scmp.eq.s32.totalorder %s17, 1
    %p158 = por %p156, %p157
    %p159 = scmp.ne.s32.totalorder %s148, %s149
    %p160 = scmp.eq.s32.totalorder %s17, 0
    %p161 = por %p159, %p160
    %p162 = scmp.ne.s32.totalorder %s148, %s149
    %p163 = scmp.eq.s32.totalorder %s18, 1
    %p164 = por %p162, %p163
    %p166 = scmp.ne.s32.totalorder %s149, %s165
    %p167 = scmp.eq.s32.totalorder %s18, 0
    %p168 = por %p166, %p167
    %s169 = ssub.s32 %s19, %s38
    %s170 = ssub.s32 %s20, %s34
    %s171 = sor.u32 %s169, %s170
    %p172 = scmp.eq.s32.totalorder %s171, 0
    %s174 = sadd.s32 %s173, 1
    %s175 = scalar_select %p172, %s173, %s174
    %p178 = pneg %p172
    %p179 = scmp.eq.s32.totalorder %s12, 1
    %p180 = por %p178, %p179
    %p181 = scmp.ne.s32.totalorder %s173, %s176
    %p182 = scmp.eq.s32.totalorder %s12, 0
    %p183 = por %p181, %p182
    %p184 = scmp.ne.s32.totalorder %s173, %s176
    %p185 = scmp.eq.s32.totalorder %s17, 1
    %p186 = por %p184, %p185
    %p187 = scmp.ne.s32.totalorder %s176, %s177
    %p188 = scmp.eq.s32.totalorder %s17, 0
    %p189 = por %p187, %p188
    %p190 = scmp.ne.s32.totalorder %s176, %s177
    %p191 = scmp.eq.s32.totalorder %s18, 1
    %p192 = por %p190, %p191
    %p194 = scmp.ne.s32.totalorder %s177, %s193
    %p195 = scmp.eq.s32.totalorder %s18, 0
    %p196 = por %p194, %p195
    %s197 = ssub.s32 %s19, %s38
    %s198 = ssub.s32 %s20, %s34
    %s199 = sor.u32 %s197, %s198
    %p200 = scmp.eq.s32.totalorder %s199, 0
    %s202 = sadd.s32 %s201, 1
    %s203 = scalar_select %p200, %s201, %s202
    %p206 = pneg %p200
    %p207 = scmp.eq.s32.totalorder %s12, 1
    %p208 = por %p206, %p207
    %p209 = scmp.ne.s32.totalorder %s201, %s204
    %p210 = scmp.eq.s32.totalorder %s12, 0
    %p211 = por %p209, %p210
    %p212 = scmp.ne.s32.totalorder %s201, %s204
    %p213 = scmp.eq.s32.totalorder %s17, 1
    %p214 = por %p212, %p213
    %p215 = scmp.ne.s32.totalorder %s204, %s205
    %p216 = scmp.eq.s32.totalorder %s17, 0
    %p217 = por %p215, %p216
    %p218 = scmp.ne.s32.totalorder %s204, %s205
    %p219 = scmp.eq.s32.totalorder %s18, 1
    %p220 = por %p218, %p219
    %p222 = scmp.ne.s32.totalorder %s205, %s221
    %p223 = scmp.eq.s32.totalorder %s18, 0
    %p224 = por %p222, %p223
    %p225 = scmp.le.s32.totalorder 1, %s12
    %p226 = scmp.lt.s32.totalorder %s12, 3
    %p227 = pnand %p225, %p226
    %p228 = pneg %p227
    // Predicated region
    $region9: #{_cross_entropy_losses.1} parent=5 // pred_check
      _
    $region10: #{_cross_entropy_losses.1} parent=5 // pred_check_branch
      %230 = sbr.rel (%p227) target = $region12
    $region11: #{_cross_entropy_losses.1} parent=5 // pred_region
      %s231 = ssub.s32 %s12, 1
    $region12: #{_cross_entropy_losses.1} parent=5 // pred_fallthru
      _
    %p232 = scmp.lt.s32.totalorder %s12, 2
    // Predicated region
    $region13: #{_cross_entropy_losses.1} parent=5 // pred_check
      %p233 = pneg %p232
    $region14: #{_cross_entropy_losses.1} parent=5 // pred_check_branch
      %235 = sbr.rel (%p233) target = $region16
    $region15: #{_cross_entropy_losses.1} parent=5 // pred_region
      // Predicated region
      $region17: #{_cross_entropy_losses.1} parent=15 // pred_check
        %p236 = pneg %p59
      $region18: #{_cross_entropy_losses.1} parent=15 // pred_check_branch
        %238 = sbr.rel (%p236) target = $region20
      $region19: #{_cross_entropy_losses.1} parent=15 // pred_region
        %s239 = sadd.s32 %s20, %s21
        %p240 = scmp.lt.s32.totalorder %s239, 0
        %s241 = scalar_select %p240, %s239, 0
        %s242 = smul.u32 2, %s241
        %p243 = scmp.lt.s32.totalorder %s19, 1
        %s244 = scalar_select %p243, %s19, 1
        %p245 = scmp.lt.s32.totalorder %s242, 1
        %s246 = scalar_select %p245, %s242, 1
        %s247 = smul.addr %s244, 2
        %s248 = sadd.s32 %s246, %s247
        %s249 = scalar_lea.vmem %s0, %s248
        %s250 = sadd.s32 %s20, %s21
        %p251 = scmp.lt.s32.totalorder %s250, 0
        %s252 = scalar_select %p251, %s250, 0
        %s253 = smul.u32 2, %s252
      $region20: #{_cross_entropy_losses.1} parent=15 // pred_fallthru
        _
      // Predicated region
      $region21: #{_cross_entropy_losses.1} parent=15 // pred_check
        %p254 = pneg %p93
      $region22: #{_cross_entropy_losses.1} parent=15 // pred_check_branch
        %256 = sbr.rel (%p254) target = $region24
      $region23: #{_cross_entropy_losses.1} parent=15 // pred_region
        %s257 = sadd.s32 %s20, %s21
        %p258 = scmp.lt.s32.totalorder %s257, 0
        %s259 = scalar_select %p258, %s257, 0
        %s260 = smul.u32 2, %s259
        %p261 = scmp.lt.s32.totalorder %s19, 1
        %s262 = scalar_select %p261, %s19, 1
        %p263 = scmp.lt.s32.totalorder %s260, 1
        %s264 = scalar_select %p263, %s260, 1
        %s265 = smul.addr %s262, 2
        %s266 = sadd.s32 %s264, %s265
        %s267 = smul.addr %s266, 4
        %s268 = scalar_lea.vmem %s1, %s267
        %s269 = sadd.s32 %s20, %s21
        %p270 = scmp.lt.s32.totalorder %s269, 0
        %s271 = scalar_select %p270, %s269, 0
        %s272 = smul.u32 2, %s271
      $region24: #{_cross_entropy_losses.1} parent=15 // pred_fallthru
        _
      // Predicated region
      $region25: #{_cross_entropy_losses.1} parent=15 // pred_check
        %p273 = pneg %p127
      $region26: #{_cross_entropy_losses.1} parent=15 // pred_check_branch
        %275 = sbr.rel (%p273) target = $region28
      $region27: #{_cross_entropy_losses.1} parent=15 // pred_region
        %s276 = sadd.s32 %s20, %s21
        %p277 = scmp.lt.s32.totalorder %s276, 0
        %s278 = scalar_select %p277, %s276, 0
        %s279 = smul.u32 2, %s278
        %p280 = scmp.lt.s32.totalorder %s19, 1
        %s281 = scalar_select %p280, %s19, 1
        %p282 = scmp.lt.s32.totalorder %s279, 1
        %s283 = scalar_select %p282, %s279, 1
        %s284 = smul.addr %s281, 2
        %s285 = sadd.s32 %s283, %s284
        %s286 = smul.addr %s285, 4
        %s287 = scalar_lea.vmem %s2, %s286
        %s288 = sadd.s32 %s20, %s21
        %p289 = scmp.lt.s32.totalorder %s288, 0
        %s290 = scalar_select %p289, %s288, 0
        %s291 = smul.u32 2, %s290
      $region28: #{_cross_entropy_losses.1} parent=15 // pred_fallthru
        _
    $region16: #{_cross_entropy_losses.1} parent=5 // pred_fallthru
      _
    %p292 = scmp.le.s32.totalorder 1, %s12
    %p293 = scmp.lt.s32.totalorder %s12, 3
    %p294 = pnand %p292, %p293
    %p295 = pneg %p294
    // Predicated region
    $region29: #{_cross_entropy_losses.1} parent=5 // pred_check
      _
    $region30: #{_cross_entropy_losses.1} parent=5 // pred_check_branch
      %297 = sbr.rel (%p294) target = $region32
    $region31: #{_cross_entropy_losses.1} parent=5 // pred_region
      %s298 = ssub.s32 %s12, 1
      %s299 = sadd.s32 %s23, %s24
      %p300 = scmp.lt.s32.totalorder %s299, 0
      %s301 = scalar_select %p300, %s299, 0
      %s302 = smul.u32 2, %s301
      %p303 = scmp.lt.s32.totalorder %s22, 1
      %s304 = scalar_select %p303, %s22, 1
      %p305 = scmp.lt.s32.totalorder %s302, 1
      %s306 = scalar_select %p305, %s302, 1
      %s307 = smul.addr %s304, 2
      %s308 = sadd.s32 %s306, %s307
      %s309 = scalar_lea.vmem %s0, %s308
      %p310 = pneg %p65
      %p311 = pneg %p62
      %s312 = sadd.s32 %s23, %s24
      %p313 = scmp.lt.s32.totalorder %s312, 0
      %s314 = scalar_select %p313, %s312, 0
      %s315 = smul.u32 2, %s314
      %p316 = scmp.lt.s32.totalorder %s22, 1
      %s317 = scalar_select %p316, %s22, 1
      %p318 = scmp.lt.s32.totalorder %s315, 1
      %s319 = scalar_select %p318, %s315, 1
      %s320 = smul.addr %s317, 2
      %s321 = sadd.s32 %s319, %s320
      %s322 = smul.addr %s321, 4
      %s323 = scalar_lea.vmem %s1, %s322
      %p324 = pneg %p99
      %p325 = pneg %p96
      %s326 = sadd.s32 %s23, %s24
      %p327 = scmp.lt.s32.totalorder %s326, 0
      %s328 = scalar_select %p327, %s326, 0
      %s329 = smul.u32 2, %s328
      %p330 = scmp.lt.s32.totalorder %s22, 1
      %s331 = scalar_select %p330, %s22, 1
      %p332 = scmp.lt.s32.totalorder %s329, 1
      %s333 = scalar_select %p332, %s329, 1
      %s334 = smul.addr %s331, 2
      %s335 = sadd.s32 %s333, %s334
      %s336 = smul.addr %s335, 4
      %s337 = scalar_lea.vmem %s2, %s336
      %p338 = pneg %p133
      %p339 = pneg %p130
      %p340 = pneg %p161
      %p341 = pneg %p158
      %p342 = scmp.lt.s32.totalorder %s22, 1
      %s343 = scalar_select %p342, %s22, 1
      %p344 = scmp.lt.s32.totalorder %s23, 0
      %s345 = scalar_select %p344, %s23, 0
      %s346 = sadd.s32 %s345, %s343
      %s347 = scalar_lea.vmem %s3, %s346
      %p348 = pneg %p189
      %p349 = pneg %p186
      %p350 = scmp.lt.s32.totalorder %s22, 1
      %s351 = scalar_select %p350, %s22, 1
      %p352 = scmp.lt.s32.totalorder %s23, 0
      %s353 = scalar_select %p352, %s23, 0
      %s354 = sadd.s32 %s353, %s351
      %s355 = scalar_lea.vmem %s4, %s354
      %p356 = pneg %p217
      %p357 = pneg %p214
      %p358 = scmp.lt.s32.totalorder %s22, 1
      %s359 = scalar_select %p358, %s22, 1
      %p360 = scmp.lt.s32.totalorder %s23, 0
      %s361 = scalar_select %p360, %s23, 0
      %s362 = sadd.s32 %s361, %s359
      %s363 = scalar_lea.vmem %s5, %s362
      %s364 = sadd.s32 %s23, %s24
      %p365 = scmp.lt.s32.totalorder %s364, 0
      %s366 = scalar_select %p365, %s364, 0
      %s367 = smul.u32 2, %s366
      %p368 = scmp.lt.s32.totalorder %s22, 1
      %s369 = scalar_select %p368, %s22, 1
      %p370 = scmp.lt.s32.totalorder %s367, 1
      %s371 = scalar_select %p370, %s367, 1
      %s372 = smul.addr %s369, 2
      %s373 = sadd.s32 %s371, %s372
      %s374 = scalar_lea.vmem %s0, %s373
      %s375 = sadd.s32 %s23, %s24
      %p376 = scmp.lt.s32.totalorder %s375, 0
      %s377 = scalar_select %p376, %s375, 0
      %s378 = smul.u32 2, %s377
      %s379 = sadd.s32 %s23, %s24
      %p380 = scmp.lt.s32.totalorder %s379, 0
      %s381 = scalar_select %p380, %s379, 0
      %s382 = smul.u32 2, %s381
      %p383 = scmp.lt.s32.totalorder %s22, 1
      %s384 = scalar_select %p383, %s22, 1
      %p385 = scmp.lt.s32.totalorder %s382, 1
      %s386 = scalar_select %p385, %s382, 1
      %s387 = smul.addr %s384, 2
      %s388 = sadd.s32 %s386, %s387
      %s389 = smul.addr %s388, 4
      %s390 = scalar_lea.vmem %s1, %s389
      %s391 = sadd.s32 %s23, %s24
      %p392 = scmp.lt.s32.totalorder %s391, 0
      %s393 = scalar_select %p392, %s391, 0
      %s394 = smul.u32 2, %s393
      %s395 = sadd.s32 %s23, %s24
      %p396 = scmp.lt.s32.totalorder %s395, 0
      %s397 = scalar_select %p396, %s395, 0
      %s398 = smul.u32 2, %s397
      %p399 = scmp.lt.s32.totalorder %s22, 1
      %s400 = scalar_select %p399, %s22, 1
      %p401 = scmp.lt.s32.totalorder %s398, 1
      %s402 = scalar_select %p401, %s398, 1
      %s403 = smul.addr %s400, 2
      %s404 = sadd.s32 %s402, %s403
      %s405 = smul.addr %s404, 4
      %s406 = scalar_lea.vmem %s2, %s405
      %s407 = sadd.s32 %s23, %s24
      %p408 = scmp.lt.s32.totalorder %s407, 0
      %s409 = scalar_select %p408, %s407, 0
      %s410 = smul.u32 2, %s409
      %p411 = scmp.lt.s32.totalorder %s22, 1
      %s412 = scalar_select %p411, %s22, 1
      %p413 = scmp.lt.s32.totalorder %s23, 0
      %s414 = scalar_select %p413, %s23, 0
      %s415 = sadd.s32 %s414, %s412
      %s416 = scalar_lea.vmem %s3, %s415
      %p417 = scmp.lt.s32.totalorder %s22, 1
      %s418 = scalar_select %p417, %s22, 1
      %p419 = scmp.lt.s32.totalorder %s23, 0
      %s420 = scalar_select %p419, %s23, 0
      %s421 = sadd.s32 %s420, %s418
      %s422 = scalar_lea.vmem %s4, %s421
      %p423 = scmp.lt.s32.totalorder %s22, 1
      %s424 = scalar_select %p423, %s22, 1
      %p425 = scmp.lt.s32.totalorder %s23, 0
      %s426 = scalar_select %p425, %s23, 0
      %s427 = sadd.s32 %s426, %s424
      %s428 = scalar_lea.vmem %s5, %s427
      %p429 = scmp.eq.s32.totalorder %s24, 0
      // Predicated region
      $region33: #{_cross_entropy_losses.1} parent=31 // pred_check
        %p430 = pneg %p429
      $region34: #{_cross_entropy_losses.1} parent=31 // pred_check_branch
        %432 = sbr.rel (%p430) target = $region36
      $region35: #{_cross_entropy_losses.1} parent=31 // pred_region
        %v433 = vlaneseq
        %vm434 = vcmp.ge.s32.totalorder %v433, 0
        %vm435 = vcmp.lt.s32.totalorder %v433, 256
        %vm436 = vmand %vm434, %vm435
        %437 = vst.msk [vmem:[#allocation2] sm:$0x3] %vm436, 0.0
        %438 = vst.msk [vmem:[#allocation3] sm:$0x3] %vm436, 0.0
        %439 = vst.msk [vmem:[#allocation4] sm:$0x3] %vm436, 0.0
      $region36: #{_cross_entropy_losses.1} parent=31 // pred_fallthru
        _
      %v440 = vld [vmem:[%s374] sm:$0x3]
      %vm441 = vcmp.ne.s32.totalorder %v440, 255
      %v442 = vld [vmem:[#allocation4] sm:$0x3]
      %v443 = vsel %vm441, 1, 0
      %v444 = vcvt.s32.f32 %v443
      %v445 = vadd.f32 %v442, %v444
      %v446 = vlaneseq
      %vm447 = vcmp.ge.s32.totalorder %v446, 0
      %vm448 = vcmp.lt.s32.totalorder %v446, 256
      %vm449 = vmand %vm447, %vm448
      %450 = vst.msk [vmem:[#allocation4] sm:$0x3] %vm449, %v445
      %v451 = vlaneseq
      %v452 = vshrl.u32 %v451, 7
      %v453 = vperm.slane %v440, 0
      %v454 = vperm.slane %v440, 1
      %vm455 = vcmp.eq.s32.totalorder %v452, %v453
      %vm456 = vcmp.eq.s32.totalorder %v452, %v454
      %v457 = vld [vmem:[%s390] sm:$0xff]
      %459 = vst [vmem:[#allocation1] ss:$2 sm:$0xff] %v457
      %v460 = vld.sshfl [vmem:[#allocation1] sm:$0xff pattern:$0x75316420]
      %v461 = vld.sshfl [vmem:[#allocation1 + $0x8] sm:$0xff pattern:$0x75316420]
      %vm464 = vcmask 1043456
      %v465 = vsel %vm464, %v460, -inf
      %v466 = vrot.slane %v465, 4
      %v467 = vmax.f32 %v465, %v466
      %v468 = vrot.slane %v467, 2
      %v469 = vmax.f32 %v467, %v468
      %v470 = vrot.slane %v469, 1
      %v471 = vmax.f32 %v469, %v470
      %v472 = vsel %vm464, %v461, -inf
      %v473 = vrot.slane %v472, 4
      %v474 = vmax.f32 %v472, %v473
      %v475 = vrot.slane %v474, 2
      %v476 = vmax.f32 %v474, %v475
      %v477 = vrot.slane %v476, 1
      %v478 = vmax.f32 %v476, %v477
      %v481 = vrot.slane %v478, 4
      %v482 = vsel %vm464, %v471, %v481
      %v484 = vsub.f32 %v457, %v482
      %v485 = vmul.f32 %v484, 1.442695
      %v486 = vpow.pop %v485
      %488 = vst [vmem:[#allocation1] ss:$2 sm:$0xff] %v486
      %v489 = vld.sshfl [vmem:[#allocation1] sm:$0xff pattern:$0x75316420]
      %v490 = vld.sshfl [vmem:[#allocation1 + $0x8] sm:$0xff pattern:$0x75316420]
      %v493 = vsel %vm464, %v489, 0.0
      %v494 = vrot.slane %v493, 4
      %v495 = vadd.f32 %v493, %v494
      %v496 = vrot.slane %v495, 2
      %v497 = vadd.f32 %v495, %v496
      %v498 = vrot.slane %v497, 1
      %v499 = vadd.f32 %v497, %v498
      %v500 = vsel %vm464, %v490, 0.0
      %v501 = vrot.slane %v500, 4
      %v502 = vadd.f32 %v500, %v501
      %v503 = vrot.slane %v502, 2
      %v504 = vadd.f32 %v502, %v503
      %v505 = vrot.slane %v504, 1
      %v506 = vadd.f32 %v504, %v505
      %v507 = vlog2.pop %v499
      %v508 = vmul.f32 %v507, 0.6931472
      %v509 = vlog2.pop %v506
      %v510 = vmul.f32 %v509, 0.6931472
      %v511 = vadd.f32 %v508, %v471
      %v512 = vadd.f32 %v510, %v478
      %513 = vst [vmem:[#allocation1] ss:$2 sm:$0xff] %v457
      %v514 = vld.sshfl [vmem:[#allocation1] sm:$0xff pattern:$0x75316420]
      %v515 = vld.sshfl [vmem:[#allocation1 + $0x8] sm:$0xff pattern:$0x75316420]
      %v518 = vsel %vm455, %v514, 0.0
      %v519 = vsel %vm456, %v515, 0.0
      %v520 = vsel %vm464, %v518, 0.0
      %v521 = vrot.slane %v520, 4
      %v522 = vadd.f32 %v520, %v521
      %v523 = vrot.slane %v522, 2
      %v524 = vadd.f32 %v522, %v523
      %v525 = vrot.slane %v524, 1
      %v526 = vadd.f32 %v524, %v525
      %v527 = vsel %vm464, %v519, 0.0
      %v528 = vrot.slane %v527, 4
      %v529 = vadd.f32 %v527, %v528
      %v530 = vrot.slane %v529, 2
      %v531 = vadd.f32 %v529, %v530
      %v532 = vrot.slane %v531, 1
      %v533 = vadd.f32 %v531, %v532
      %v534 = vld [vmem:[#allocation2] sm:$0x3]
      %v535 = vsub.f32 %v511, %v526
      %v536 = vsub.f32 %v512, %v533
      %v539 = vrot.slane %v536, 7
      %vm540 = vcmask 1040384
      %v541 = vsel %vm540, %v535, %v539
      %v543 = vsel %vm441, %v541, 0.0
      %v544 = vadd.f32 %v534, %v543
      %545 = vst.msk [vmem:[#allocation2] sm:$0x3] %vm449, %v544
      %v546 = vld [vmem:[%s406] sm:$0xff]
      %548 = vst [vmem:[#allocation1] ss:$2 sm:$0xff] %v546
      %v549 = vld.sshfl [vmem:[#allocation1] sm:$0xff pattern:$0x75316420]
      %v550 = vld.sshfl [vmem:[#allocation1 + $0x8] sm:$0xff pattern:$0x75316420]
      %v553 = vsel %vm464, %v549, -inf
      %v554 = vrot.slane %v553, 4
      %v555 = vmax.f32 %v553, %v554
      %v556 = vrot.slane %v555, 2
      %v557 = vmax.f32 %v555, %v556
      %v558 = vrot.slane %v557, 1
      %v559 = vmax.f32 %v557, %v558
      %v560 = vsel %vm464, %v550, -inf
      %v561 = vrot.slane %v560, 4
      %v562 = vmax.f32 %v560, %v561
      %v563 = vrot.slane %v562, 2
      %v564 = vmax.f32 %v562, %v563
      %v565 = vrot.slane %v564, 1
      %v566 = vmax.f32 %v564, %v565
      %v569 = vrot.slane %v566, 4
      %v570 = vsel %vm464, %v559, %v569
      %v572 = vsub.f32 %v546, %v570
      %v573 = vmul.f32 %v572, 1.442695
      %v574 = vpow.pop %v573
      %576 = vst [vmem:[#allocation1] ss:$2 sm:$0xff] %v574
      %v577 = vld.sshfl [vmem:[#allocation1] sm:$0xff pattern:$0x75316420]
      %v578 = vld.sshfl [vmem:[#allocation1 + $0x8] sm:$0xff pattern:$0x75316420]
      %v581 = vsel %vm464, %v577, 0.0
      %v582 = vrot.slane %v581, 4
      %v583 = vadd.f32 %v581, %v582
      %v584 = vrot.slane %v583, 2
      %v585 = vadd.f32 %v583, %v584
      %v586 = vrot.slane %v585, 1
      %v587 = vadd.f32 %v585, %v586
      %v588 = vsel %vm464, %v578, 0.0
      %v589 = vrot.slane %v588, 4
      %v590 = vadd.f32 %v588, %v589
      %v591 = vrot.slane %v590, 2
      %v592 = vadd.f32 %v590, %v591
      %v593 = vrot.slane %v592, 1
      %v594 = vadd.f32 %v592, %v593
      %v595 = vlog2.pop %v587
      %v596 = vmul.f32 %v595, 0.6931472
      %v597 = vlog2.pop %v594
      %v598 = vmul.f32 %v597, 0.6931472
      %v599 = vadd.f32 %v596, %v559
      %v600 = vadd.f32 %v598, %v566
      %601 = vst [vmem:[#allocation1] ss:$2 sm:$0xff] %v546
      %v602 = vld.sshfl [vmem:[#allocation1] sm:$0xff pattern:$0x75316420]
      %v603 = vld.sshfl [vmem:[#allocation1 + $0x8] sm:$0xff pattern:$0x75316420]
      %v606 = vsel %vm455, %v602, 0.0
      %v607 = vsel %vm456, %v603, 0.0
      %v608 = vsel %vm464, %v606, 0.0
      %v609 = vrot.slane %v608, 4
      %v610 = vadd.f32 %v608, %v609
      %v611 = vrot.slane %v610, 2
      %v612 = vadd.f32 %v610, %v611
      %v613 = vrot.slane %v612, 1
      %v614 = vadd.f32 %v612, %v613
      %v615 = vsel %vm464, %v607, 0.0
      %v616 = vrot.slane %v615, 4
      %v617 = vadd.f32 %v615, %v616
      %v618 = vrot.slane %v617, 2
      %v619 = vadd.f32 %v617, %v618
      %v620 = vrot.slane %v619, 1
      %v621 = vadd.f32 %v619, %v620
      %v622 = vld [vmem:[#allocation3] sm:$0x3]
      %v623 = vsub.f32 %v599, %v614
      %v624 = vsub.f32 %v600, %v621
      %v627 = vrot.slane %v624, 7
      %v628 = vsel %vm540, %v623, %v627
      %v630 = vsel %vm441, %v628, 0.0
      %v631 = vadd.f32 %v622, %v630
      %632 = vst.msk [vmem:[#allocation3] sm:$0x3] %vm449, %v631
      // Predicated region
      $region37: #{_cross_entropy_losses.1} parent=31 // pred_check
        %p633 = pneg %p429
      $region38: #{_cross_entropy_losses.1} parent=31 // pred_check_branch
        %635 = sbr.rel (%p633) target = $region40
      $region39: #{_cross_entropy_losses.1} parent=31 // pred_region
        %v636 = vld [vmem:[#allocation2] sm:$0x3]
        %v638 = vperm.slane %v636, 0
        %v639 = vperm.slane %v636, 1
        %v642 = vsel %vm540, %v638, 0.0
        %v643 = vsel %vm540, %v639, 0.0
        %v644 = vadd.f32 %v642, %v643
        %645 = vadd.xlane.f32.xlu0 %v644
        %v646 = vpop.xlane.xlu0 %645
        %v647 = vrot.slane %v646, 4
        %v648 = vadd.f32 %v646, %v647
        %v649 = vrot.slane %v648, 2
        %v650 = vadd.f32 %v648, %v649
        %v651 = vrot.slane %v650, 1
        %v652 = vadd.f32 %v650, %v651
        %s653 = vtos %v652
        %v654 = vstv %s653
        %vm655 = vcmask 0
        %656 = vst.msk [vmem:[%s416] sm:$0x1] %vm655, %v654
        %v657 = vld [vmem:[#allocation3] sm:$0x3]
        %v659 = vperm.slane %v657, 0
        %v660 = vperm.slane %v657, 1
        %v663 = vsel %vm540, %v659, 0.0
        %v664 = vsel %vm540, %v660, 0.0
        %v665 = vadd.f32 %v663, %v664
        %666 = vadd.xlane.f32.xlu0 %v665
        %v667 = vpop.xlane.xlu0 %666
        %v668 = vrot.slane %v667, 4
        %v669 = vadd.f32 %v667, %v668
        %v670 = vrot.slane %v669, 2
        %v671 = vadd.f32 %v669, %v670
        %v672 = vrot.slane %v671, 1
        %v673 = vadd.f32 %v671, %v672
        %s674 = vtos %v673
        %v675 = vstv %s674
        %676 = vst.msk [vmem:[%s422] sm:$0x1] %vm655, %v675
        %v677 = vld [vmem:[#allocation4] sm:$0x3]
        %v679 = vperm.slane %v677, 0
        %v680 = vperm.slane %v677, 1
        %v683 = vsel %vm540, %v679, 0.0
        %v684 = vsel %vm540, %v680, 0.0
        %v685 = vadd.f32 %v683, %v684
        %686 = vadd.xlane.f32.xlu0 %v685
        %v687 = vpop.xlane.xlu0 %686
        %v688 = vrot.slane %v687, 4
        %v689 = vadd.f32 %v687, %v688
        %v690 = vrot.slane %v689, 2
        %v691 = vadd.f32 %v689, %v690
        %v692 = vrot.slane %v691, 1
        %v693 = vadd.f32 %v691, %v692
        %s694 = vtos %v693
        %v695 = vstv %s694
        %696 = vst.msk [vmem:[%s428] sm:$0x1] %vm655, %v695
      $region40: #{_cross_entropy_losses.1} parent=31 // pred_fallthru
        _
      %p697 = scmp.lt.s32.totalorder %s22, 1
      %s698 = scalar_select %p697, %s22, 1
      %p699 = scmp.lt.s32.totalorder %s23, 0
      %s700 = scalar_select %p699, %s23, 0
      %s701 = sadd.s32 %s700, %s698
      %s702 = scalar_lea.vmem %s3, %s701
      %p703 = scmp.lt.s32.totalorder %s22, 1
      %s704 = scalar_select %p703, %s22, 1
      %p705 = scmp.lt.s32.totalorder %s23, 0
      %s706 = scalar_select %p705, %s23, 0
      %s707 = sadd.s32 %s706, %s704
      %s708 = scalar_lea.vmem %s4, %s707
      %p709 = scmp.lt.s32.totalorder %s22, 1
      %s710 = scalar_select %p709, %s22, 1
      %p711 = scmp.lt.s32.totalorder %s23, 0
      %s712 = scalar_select %p711, %s23, 0
      %s713 = sadd.s32 %s712, %s710
      %s714 = scalar_lea.vmem %s5, %s713
      // Predicated region
      $region41: #{_cross_entropy_losses.1} parent=31 // pred_check
        %p715 = pneg %p158
      $region42: #{_cross_entropy_losses.1} parent=31 // pred_check_branch
        %717 = sbr.rel (%p715) target = $region44
      $region43: #{_cross_entropy_losses.1} parent=31 // pred_region
        _
      $region44: #{_cross_entropy_losses.1} parent=31 // pred_fallthru
        _
      // Predicated region
      $region45: #{_cross_entropy_losses.1} parent=31 // pred_check
        %p718 = pneg %p186
      $region46: #{_cross_entropy_losses.1} parent=31 // pred_check_branch
        %720 = sbr.rel (%p718) target = $region48
      $region47: #{_cross_entropy_losses.1} parent=31 // pred_region
        _
      $region48: #{_cross_entropy_losses.1} parent=31 // pred_fallthru
        _
      // Predicated region
      $region49: #{_cross_entropy_losses.1} parent=31 // pred_check
        %p721 = pneg %p214
      $region50: #{_cross_entropy_losses.1} parent=31 // pred_check_branch
        %723 = sbr.rel (%p721) target = $region52
      $region51: #{_cross_entropy_losses.1} parent=31 // pred_region
        _
      $region52: #{_cross_entropy_losses.1} parent=31 // pred_fallthru
        _
    $region32: #{_cross_entropy_losses.1} parent=5 // pred_fallthru
      _
    %p724 = scmp.le.s32.totalorder 2, %s12
    // Predicated region
    $region53: #{_cross_entropy_losses.1} parent=5 // pred_check
      %p725 = pneg %p724
    $region54: #{_cross_entropy_losses.1} parent=5 // pred_check_branch
      %727 = sbr.rel (%p725) target = $region56
    $region55: #{_cross_entropy_losses.1} parent=5 // pred_region
      %s728 = ssub.s32 %s12, 2
      // Predicated region
      $region57: #{_cross_entropy_losses.1} parent=55 // pred_check
        %p729 = pneg %p164
      $region58: #{_cross_entropy_losses.1} parent=55 // pred_check_branch
        %731 = sbr.rel (%p729) target = $region60
      $region59: #{_cross_entropy_losses.1} parent=55 // pred_region
        %p732 = scmp.lt.s32.totalorder %s25, 1
        %s733 = scalar_select %p732, %s25, 1
        %p734 = scmp.lt.s32.totalorder %s26, 0
        %s735 = scalar_select %p734, %s26, 0
        %s736 = sadd.s32 %s735, %s733
        %s737 = scalar_lea.vmem %s3, %s736
      $region60: #{_cross_entropy_losses.1} parent=55 // pred_fallthru
        _
      // Predicated region
      $region61: #{_cross_entropy_losses.1} parent=55 // pred_check
        %p738 = pneg %p192
      $region62: #{_cross_entropy_losses.1} parent=55 // pred_check_branch
        %740 = sbr.rel (%p738) target = $region64
      $region63: #{_cross_entropy_losses.1} parent=55 // pred_region
        %p741 = scmp.lt.s32.totalorder %s25, 1
        %s742 = scalar_select %p741, %s25, 1
        %p743 = scmp.lt.s32.totalorder %s26, 0
        %s744 = scalar_select %p743, %s26, 0
        %s745 = sadd.s32 %s744, %s742
        %s746 = scalar_lea.vmem %s4, %s745
      $region64: #{_cross_entropy_losses.1} parent=55 // pred_fallthru
        _
      // Predicated region
      $region65: #{_cross_entropy_losses.1} parent=55 // pred_check
        %p747 = pneg %p220
      $region66: #{_cross_entropy_losses.1} parent=55 // pred_check_branch
        %749 = sbr.rel (%p747) target = $region68
      $region67: #{_cross_entropy_losses.1} parent=55 // pred_region
        %p750 = scmp.lt.s32.totalorder %s25, 1
        %s751 = scalar_select %p750, %s25, 1
        %p752 = scmp.lt.s32.totalorder %s26, 0
        %s753 = scalar_select %p752, %s26, 0
        %s754 = sadd.s32 %s753, %s751
        %s755 = scalar_lea.vmem %s5, %s754
      $region68: #{_cross_entropy_losses.1} parent=55 // pred_fallthru
        _
    $region56: #{_cross_entropy_losses.1} parent=5 // pred_fallthru
      _
  $region6: #{_cross_entropy_losses.1} parent=0 // loop_footer
    %s16 = sadd.s32 1, %s12
  $region7: #{_cross_entropy_losses.1} parent=0 // loop_footer_branch
    %11 = sbr.rel target = $region3
  $region8: #{_cross_entropy_losses.1} parent=0 // loop_exit
    _

</llo_original>
